<compile_context>
chip_gen: v7x
topology: tpu7x:2x2x1
jax: 0.10.0
libtpu: 0.0.40
codegen_flags: <defaults>
</compile_context>

<pallas_src>
import jax
import jax.numpy as jnp
from jax.experimental import pallas as pl
from jax.experimental.pallas import tpu as pltpu

_TARGET_TILE_BYTES = 2 * 1024 * 1024   # 2x(in+out) double-buffer = 8 MiB -> fits v5e's 16 MiB scoped VMEM
_MIN_GRID_STEPS = 8                    # >= 4 steps per core on v7x megacore
_MAX_LANES = 8192                      # widest lane extent we bother with


def _copy_kernel(x_ref, o_ref):
    # Straight VMEM tile copy; all squeeze semantics live in the wrapper
    # (reshapes before/after are free: row-major byte layout is unchanged).
    o_ref[...] = x_ref[...]


def _prod(shape):
    n = 1
    for s in shape:
        n *= s
    return n


def _block_spec(shape, index_map, buffer_count):
    """BlockSpec with optional N-deep pipelining (falls back to default)."""
    if buffer_count > 2:
        try:
            return pl.BlockSpec(shape, index_map, pipeline_mode=pl.Buffered(buffer_count))
        except TypeError:
            pass
    return pl.BlockSpec(shape, index_map)


def _choose_lane_dense_tiling(total, itemsize):
    """Return (rows, lanes, block_rows) for a lane-dense 2D slab, or None."""
    if total % 128 != 0:
        return None
    # Sublane packing multiple: f32->8, bf16->16, int8/fp8->32.
    sub = max(8, 32 // max(1, itemsize))

    # Lanes: widest multiple of 128 dividing `total`, capped so
    #  (a) a `sub`-row tile stays under the byte budget, and
    #  (b) enough rows remain for >= _MIN_GRID_STEPS steps of >= sub rows.
    budget_cap = max(128, (_TARGET_TILE_BYTES // (sub * itemsize)) // 128 * 128)
    steps_cap = max(128, (total // (_MIN_GRID_STEPS * sub)) // 128 * 128)
    cap = min(_MAX_LANES, budget_cap, steps_cap, total)
    lanes = 128
    l = 256
    while l <= cap:
        if total % l == 0:
            lanes = l
        l += 128
    rows = total // lanes

    # Rows per tile: multiple of `sub` dividing rows, tile <= byte budget.
    # Prefer the largest tile that still leaves >= _MIN_GRID_STEPS steps;
    # for small arrays keep >= 2 steps so in/out DMAs of adjacent tiles overlap.
    max_rows = max(sub, _TARGET_TILE_BYTES // (lanes * itemsize))
    candidates = [r for r in range(sub, rows + 1, sub)
                  if rows % r == 0 and r <= max_rows]
    if not candidates:
        return rows, lanes, rows            # whole-extent block (always legal)
    with_steps = [r for r in candidates if rows // r >= _MIN_GRID_STEPS]
    if with_steps:
        block_rows = max(with_steps)
    else:
        two = [r for r in candidates if rows // r >= 2]
        block_rows = max(two) if two else max(candidates)
    return rows, lanes, block_rows


def _tiled_copy_2d(x2, rows, lanes, block_rows, donate):
    grid_steps = rows // block_rows
    tile_bytes = block_rows * lanes * x2.dtype.itemsize
    buffers = 3 if (grid_steps >= _MIN_GRID_STEPS
                    and 6 * tile_bytes <= 12 * 1024 * 1024) else 2
    kwargs = {"input_output_aliases": {0: 0}} if donate else {}
    return pl.pallas_call(
        _copy_kernel,
        out_shape=jax.ShapeDtypeStruct((rows, lanes), x2.dtype),
        grid=(grid_steps,),
        in_specs=[_block_spec((block_rows, lanes), lambda i: (i, 0), buffers)],
        out_specs=_block_spec((block_rows, lanes), lambda i: (i, 0), buffers),
        compiler_params=pltpu.CompilerParams(
            dimension_semantics=("parallel",)),
        **kwargs,
    )(x2)


def _tiled_copy_leading(x3, lead, R, C, itemsize, donate):
    """Fallback: tile over flattened leading dims, full (legal) trailing dims."""
    per_block_bytes = R * C * itemsize
    max_lead = max(1, _TARGET_TILE_BYTES // per_block_bytes)

    def _largest_divisor(limit, min_steps):
        d = min(lead, limit)
        while d >= 1:
            if lead % d == 0 and lead // d >= min_steps:
                return d
            d -= 1
        return None

    block_lead = (_largest_divisor(max_lead, _MIN_GRID_STEPS)
                  or _largest_divisor(max_lead, 2)
                  or _largest_divisor(max_lead, 1)
                  or 1)
    grid_steps = lead // block_lead

    # Only override the scoped-VMEM limit when one (in+out, double-buffered)
    # trailing slab genuinely needs it; stay under v7x's 64 MiB physical.
    needed = 4 * block_lead * per_block_bytes + (1 << 20)
    if needed > 16 * 1024 * 1024:
        cparams = pltpu.CompilerParams(
            dimension_semantics=("parallel",),
            vmem_limit_bytes=min(needed, 60 * 1024 * 1024))
    else:
        cparams = pltpu.CompilerParams(dimension_semantics=("parallel",))

    kwargs = {"input_output_aliases": {0: 0}} if donate else {}
    return pl.pallas_call(
        _copy_kernel,
        out_shape=jax.ShapeDtypeStruct((lead, R, C), x3.dtype),
        grid=(grid_steps,),
        in_specs=[pl.BlockSpec((block_lead, R, C), lambda i: (i, 0, 0))],
        out_specs=pl.BlockSpec((block_lead, R, C), lambda i: (i, 0, 0)),
        compiler_params=cparams,
        **kwargs,
    )(x3)


def squeeze_pallas(x, dim, *, force_pallas_copy=False, donate_input=False):
    """Equivalent of torch.Tensor.squeeze(dim).

    Default path: zero-cost metadata reshape (no kernel, no HBM traffic).
    force_pallas_copy=True materializes the result via a tiled, lane-dense
    Pallas memcpy (optionally aliasing the input buffer with donate_input).
    """
    ndim = x.ndim
    if ndim == 0:
        return x
    d = dim % ndim
    if x.shape[d] != 1:
        # torch.squeeze(dim) is a no-op when that axis is not size 1.
        return x
    out_shape = tuple(s for i, s in enumerate(x.shape) if i != d)

    if not force_pallas_copy:
        return jnp.squeeze(x, axis=d)        # pure metadata change

    total = _prod(x.shape)
    itemsize = jnp.dtype(x.dtype).itemsize

    # Degenerate outputs: nothing to pipeline, keep the metadata-only path.
    if total == 0 or len(out_shape) == 0:
        return jnp.squeeze(x, axis=d)

    tiling = _choose_lane_dense_tiling(total, itemsize)
    if tiling is not None:
        rows, lanes, block_rows = tiling
        x2 = jnp.reshape(x, (rows, lanes))   # free: row-major layout unchanged
        y2 = _tiled_copy_2d(x2, rows, lanes, block_rows, donate_input)
        return jnp.reshape(y2, out_shape)

    if len(out_shape) >= 2:
        R, C = out_shape[-2], out_shape[-1]
        lead = total // (R * C)
        x3 = jnp.reshape(x, (lead, R, C))    # free: row-major layout unchanged
        y3 = _tiled_copy_leading(x3, lead, R, C, itemsize, donate_input)
        return jnp.reshape(y3, out_shape)

    # 1-D output whose length is not a multiple of 128: metadata path.
    # TODO(synk): could pad lanes to 128 and slice, but a standalone copy of
    # a tiny 1-D array has no bandwidth worth recovering.
    return jnp.squeeze(x, axis=d)


if __name__ == "__main__":
    key = jax.random.PRNGKey(0)
    k1, k2, k3, k4 = jax.random.split(key, 4)

    # Case 1: module's typical NCHW input with a size-1 channel axis
    # (small lane-dense slab, single block).
    x1 = jax.random.normal(k1, (2, 1, 16, 16), dtype=jnp.float32)
    y1 = jax.block_until_ready(squeeze_pallas(x1, dim=1, force_pallas_copy=True))
    ref1 = jnp.squeeze(x1, axis=1)
    assert y1.shape == (2, 16, 16), y1.shape
    assert y1.dtype == x1.dtype
    assert jnp.array_equal(y1, ref1)

    # Case 2: multi-step pipelined lane-dense path (grid=(8,), so >= 4 steps
    # per core under v7x megacore sharding); also exercises negative dim.
    x2 = jax.random.normal(k2, (2, 1, 64, 128), dtype=jnp.float32)
    y2 = jax.block_until_ready(squeeze_pallas(x2, dim=-3, force_pallas_copy=True))
    assert y2.shape == (2, 64, 128), y2.shape
    assert jnp.array_equal(y2, jnp.squeeze(x2, axis=1))

    # Case 3: bf16 exercises itemsize-aware (16-sublane) tile selection.
    x3 = jax.random.normal(k3, (4, 1, 32, 128), dtype=jnp.bfloat16)
    y3 = jax.block_until_ready(squeeze_pallas(x3, dim=1, force_pallas_copy=True))
    assert y3.shape == (4, 32, 128), y3.shape
    assert y3.dtype == jnp.bfloat16
    assert jnp.array_equal(y3, jnp.squeeze(x3, axis=1))

    # Case 4: element count not a multiple of 128 -> leading-dim tiled fallback.
    x4 = jax.random.normal(k4, (6, 1, 5, 7), dtype=jnp.float32)
    y4 = jax.block_until_ready(squeeze_pallas(x4, dim=1, force_pallas_copy=True))
    assert y4.shape == (6, 5, 7), y4.shape
    assert jnp.array_equal(y4, jnp.squeeze(x4, axis=1))

    # Case 5: default metadata-only path and the size!=1 torch no-op branch.
    y5 = jax.block_until_ready(squeeze_pallas(x1, dim=1))
    assert jnp.array_equal(y5, ref1)
    x6 = jax.random.normal(k1, (2, 4, 16, 16), dtype=jnp.float32)
    y6 = jax.block_until_ready(squeeze_pallas(x6, dim=1))
    assert y6.shape == x6.shape
    assert jnp.array_equal(y6, x6)

    print("KERNEL_OK")
</pallas_src>

<mosaic_0001>
module attributes {stable_mosaic.version = 11 : i64} {
  func.func @_copy_kernel(%arg0: i32, %arg1: memref<4x128xf32, #tpu.memory_space<vmem>>, %arg2: memref<4x128xf32, #tpu.memory_space<vmem>>) attributes {dimension_semantics = [#tpu.dimension_semantics<parallel>], iteration_bounds = array<i64: 1>, scalar_prefetch = 0 : i64, scratch_operands = 0 : i64, tpu.core_type = #tpu.core_type<tc>, window_params = [{transform_indices = @transform_0, window_bounds = array<i64: 4, 128>}, {transform_indices = @transform_1, window_bounds = array<i64: 4, 128>}]} {
    %c0 = arith.constant 0 : index
    %c0_0 = arith.constant 0 : index
    %0 = vector.load %arg1[%c0, %c0_0] : memref<4x128xf32, #tpu.memory_space<vmem>>, vector<4x128xf32>
    %c0_1 = arith.constant 0 : index
    %c0_2 = arith.constant 0 : index
    %1 = vector.load %arg2[%c0_1, %c0_2] : memref<4x128xf32, #tpu.memory_space<vmem>>, vector<4x128xf32>
    tpu.vector_store %arg2[%c0_1, %c0_2], %0 {strides = array<i32>} : memref<4x128xf32, #tpu.memory_space<vmem>>, vector<4x128xf32>,
    return
  }
  func.func @transform_0(%arg0: i32) -> (i32, i32) {
    %c0_i32 = arith.constant 0 : i32
    %c0_i32_0 = arith.constant 0 : i32
    return %arg0, %c0_i32 : i32, i32
  }
  func.func @transform_1(%arg0: i32) -> (i32, i32) {
    %c0_i32 = arith.constant 0 : i32
    %c0_i32_0 = arith.constant 0 : i32
    return %arg0, %c0_i32 : i32, i32
  }
}

</mosaic_0001>

<llo_original>
// kernel: tpu_custom_call.1
$region0: #{tpu_custom_call.1}
  #allocation0 [shape = 'u32[]', space=smem, size = 0x4, offset = 0x4, fixed_abs, tag = 'smem constant byte address 0x4 - core index']
  #allocation1 [shape = 'u32[144,128]{1,0:T(1,128)}', space=vmem, size = 0x12000, scoped, tag = 'internal scratch']
  %s0 = inlined_call_operand.hbm [shape: f32[4,128], index: 0, kind: input, shape index: {}]
  %s1 = inlined_call_operand.hbm [shape: f32[4,128], index: 1, kind: output, shape index: {}]
  %s2 = sld [smem:[#allocation0]]
  $region18: #{tpu_custom_call.1} parent=0
    _
  %s4 = ssub.s32 1, %s2
  %s5 = scalar_select 0, %s4, %s2
  $region1: #{tpu_custom_call.1} parent=0
    #allocation2 [shape = 'u8[2048]{0}', space=vmem, size = 0x800, scoped, tag = 'input window, operand 0, single buffered']
    #allocation3 [shape = 's32[1]{0}', space=sflag, size = 0x4, scoped, tag = 'scoped memory for tpu_custom_call.1']
    #allocation4 [shape = 's32[1]{0}', space=sflag, size = 0x4, scoped, tag = 'scoped memory for tpu_custom_call.1']
    #allocation5 [shape = 'u8[2048]{0}', space=vmem, size = 0x800, scoped, tag = 'output window, operand 0, single buffered']
    %6 = vsyncpa [#allocation3], 0
    %7 = vsyncpa [#allocation4], 0
    // Predicated region
    $region2: #{tpu_custom_call.1} parent=1 // pred_check
      _
    $region3: #{tpu_custom_call.1} parent=1 // pred_check_branch
      %9 = sbr.rel (0) target = $region5
    $region4: #{tpu_custom_call.1} parent=1 // pred_region
      %s11 = ssub.s32 64, 64
      %12 = vsyncadd [#allocation3], %s11
      %s14 = sshll.u32 [#allocation2], 4
      %s15 = int_to_ptr.vmem [resolvable:$true] %s14
      %17 = dma.hbm_to_vmem [thread:$0]  %s0, 64, %s15, [#allocation3]
    $region5: #{tpu_custom_call.1} parent=1 // pred_fallthru
      _
    // Predicated region
    $region6: #{tpu_custom_call.1} parent=1 // pred_check
      _
    $region7: #{tpu_custom_call.1} parent=1 // pred_check_branch
      %19 = sbr.rel (0) target = $region9
    $region8: #{tpu_custom_call.1} parent=1 // pred_region
      %20 = dma.done [#allocation3], 64
    $region9: #{tpu_custom_call.1} parent=1 // pred_fallthru
      _
    %v21 = vld [vmem:[#allocation2] sm:$0xf]
    %22 = vst [vmem:[#allocation5] sm:$0xf] %v21
    // Predicated region
    $region10: #{tpu_custom_call.1} parent=1 // pred_check
      _
    $region11: #{tpu_custom_call.1} parent=1 // pred_check_branch
      %24 = sbr.rel (0) target = $region13
    $region12: #{tpu_custom_call.1} parent=1 // pred_region
      %s26 = ssub.s32 64, 64
      %27 = vsyncadd [#allocation4], %s26
      %s29 = sshll.u32 [#allocation5], 4
      %s30 = int_to_ptr.vmem [resolvable:$true] %s29
      %32 = dma.vmem_to_hbm [thread:$0]  %s30, 64, %s1, [#allocation4]
    $region13: #{tpu_custom_call.1} parent=1 // pred_fallthru
      _
    // Predicated region
    $region14: #{tpu_custom_call.1} parent=1 // pred_check
      _
    $region15: #{tpu_custom_call.1} parent=1 // pred_check_branch
      %34 = sbr.rel (0) target = $region17
    $region16: #{tpu_custom_call.1} parent=1 // pred_region
      %35 = dma.done [#allocation4], 64
    $region17: #{tpu_custom_call.1} parent=1 // pred_fallthru
      _
    %36 = vsyncpa [#allocation3], 1
    %37 = vsyncpa [#allocation4], 1

</llo_original>
